<compile_context>
chip_gen: v7x
topology: tpu7x:2x2x1
jax: 0.10.0
libtpu: 0.0.40
codegen_flags: <defaults>
</compile_context>

<pallas_src>
import functools
import math

import jax
import jax.numpy as jnp
from jax import lax
from jax.experimental import pallas as pl
from jax.experimental.pallas import tpu as pltpu


# ----------------------------- Conv1D kernel --------------------------------
def _linear_kernel(x_ref, w_ref, b_ref, o_ref):
    # GPT-2 Conv1D: out = x @ W + b  (MXU matmul, f32 accumulation)
    acc = jnp.dot(x_ref[...], w_ref[...], preferred_element_type=jnp.float32)
    o_ref[...] = (acc + b_ref[...]).astype(o_ref.dtype)


def conv1d(x2d, w, b, *, tm=512, tn=512):
    """x2d: (M, K), w: (K, N), b: (N,) -> (M, N). Tiled over (M, N), K whole.

    Tile sizes: tm multiple of 8 (or == M), tn multiple of 128 (or == N), so
    blocks satisfy the (8, 128) constraint; partial edge blocks are handled by
    Pallas. K is kept whole per block.
    """
    # TODO(synk): for very large nx (K), add a third "arbitrary" reduction axis
    # over K with a VMEM f32 accumulator to bound VMEM (v7x: 64 MiB).
    M, K = x2d.shape
    K2, N = w.shape
    assert K == K2
    tm = M if M <= tm else tm          # 512 is a multiple of 8
    tn = N if N <= tn else tn          # 512 is a multiple of 128
    b2 = b.reshape(1, N)
    grid = (pl.cdiv(M, tm), pl.cdiv(N, tn))
    return pl.pallas_call(
        _linear_kernel,
        out_shape=jax.ShapeDtypeStruct((M, N), x2d.dtype),
        grid=grid,
        in_specs=[
            pl.BlockSpec((tm, K), lambda i, j: (i, 0)),
            pl.BlockSpec((K, tn), lambda i, j: (0, j)),
            pl.BlockSpec((1, tn), lambda i, j: (0, j)),
        ],
        out_specs=pl.BlockSpec((tm, tn), lambda i, j: (i, j)),
        compiler_params=pltpu.CompilerParams(
            dimension_semantics=("parallel", "parallel")),
    )(x2d, w, b2)


# --------------------------- fused attention kernel ---------------------------
def _attn_kernel(q_ref, kv_ref, m_ref, o_ref, *, n_head, dh, scale):
    """One batch element per grid step.

    q_ref : (Tq, nx)      -- q projection output (heads still interleaved)
    kv_ref: (Tk, 2*nx)    -- kv projection output, k = [:, :nx], v = [:, nx:]
    m_ref : (1, Tk)       -- additive attention mask
    o_ref : (Tq, nx)      -- lane-dense output, merge_heads fused
    """
    nx = n_head * dh
    q = q_ref[...].astype(jnp.float32)                       # (Tq, nx)
    if scale:
        # fold 1/sqrt(dh) into q: Tq*nx multiplies instead of H*Tq*Tk divides
        q = q * jnp.float32(1.0 / math.sqrt(float(dh)))
    mask = m_ref[...].astype(jnp.float32)                    # (1, Tk)

    # TODO(synk): for long sequences, tile Tq/Tk with an online-softmax
    # accumulator instead of holding the full (Tq, Tk) score matrix per head.
    for h in range(n_head):                                  # static unrolled loop
        q_h = q[:, h * dh:(h + 1) * dh]                      # (Tq, Dh)
        k_h = kv_ref[:, h * dh:(h + 1) * dh]                 # (Tk, Dh)
        v_h = kv_ref[:, nx + h * dh: nx + (h + 1) * dh]      # (Tk, Dh)

        # q @ k^T via dot_general contracting Dh vs Dh (no pre-transpose of k)
        s = lax.dot_general(
            q_h, k_h.astype(jnp.float32),
            dimension_numbers=(((1,), (1,)), ((), ())),
            preferred_element_type=jnp.float32)              # (Tq, Tk)
        s = s + mask

        # softmax along last axis; reciprocal on EUP
        s = s - jnp.max(s, axis=-1, keepdims=True)
        e = jnp.exp(s)
        denom = jnp.sum(e, axis=-1, keepdims=True)
        p = e * pl.reciprocal(denom, approx=True)

        out_h = jnp.dot(p.astype(kv_ref.dtype), v_h,
                        preferred_element_type=jnp.float32)  # (Tq, Dh)
        # static-slice store into the (Tq, nx) output block; the HBM writeback
        # of the full block stays lane-dense.
        o_ref[:, h * dh:(h + 1) * dh] = out_h.astype(o_ref.dtype)


def fused_attention(q, kv, mask3, n_head, scale):
    """q:(B,Tq,nx), kv:(B,Tk,2*nx), mask3:(B,1,Tk) -> (B,Tq,nx) (heads merged)."""
    B, Tq, nx = q.shape
    Tk = kv.shape[1]
    dh = nx // n_head
    kern = functools.partial(_attn_kernel, n_head=n_head, dh=dh, scale=scale)
    return pl.pallas_call(
        kern,
        out_shape=jax.ShapeDtypeStruct((B, Tq, nx), q.dtype),
        grid=(B,),
        in_specs=[
            pl.BlockSpec((None, Tq, nx), lambda b: (b, 0, 0)),
            pl.BlockSpec((None, Tk, 2 * nx), lambda b: (b, 0, 0)),
            pl.BlockSpec((None, 1, Tk), lambda b: (b, 0, 0)),
        ],
        out_specs=pl.BlockSpec((None, Tq, nx), lambda b: (b, 0, 0)),
        compiler_params=pltpu.CompilerParams(
            dimension_semantics=("parallel",)),
    )(q, kv, mask3)


# ------------------------------- wrapper --------------------------------------
def cross_attention(x, ctx, params, n_head, scale=False, attention_mask=None):
    B, Tq, nx = x.shape
    _, Tk, _ = ctx.shape

    # q_attn / kv_attn projections (Conv1D); reshapes are contiguous (no copies)
    q = conv1d(x.reshape(B * Tq, nx), params["w_q"], params["b_q"]).reshape(B, Tq, nx)
    kv = conv1d(ctx.reshape(B * Tk, nx), params["w_kv"], params["b_kv"]).reshape(B, Tk, 2 * nx)

    if attention_mask is None:
        mask3 = jnp.zeros((B, 1, Tk), dtype=jnp.float32)
    else:
        mask3 = jnp.broadcast_to(attention_mask, (B, 1, 1, Tk)).reshape(B, 1, Tk)
        mask3 = mask3.astype(jnp.float32)

    # split_heads / attention / merge_heads all fused into one kernel per batch.
    # TODO(synk): attn_dropout / resid_dropout are identity at eval time;
    # training-mode stochastic dropout is not modeled here.
    a = fused_attention(q, kv, mask3, n_head, scale)          # (B, Tq, nx)

    out = conv1d(a.reshape(B * Tq, nx), params["w_p"], params["b_p"]).reshape(B, Tq, nx)
    return out


# --------------------------- pure-JAX reference --------------------------------
def cross_attention_ref(x, ctx, params, n_head, scale=False, attention_mask=None):
    B, Tq, nx = x.shape
    _, Tk, _ = ctx.shape
    dh = nx // n_head
    q = x @ params["w_q"] + params["b_q"]
    kv = ctx @ params["w_kv"] + params["b_kv"]
    k, v = kv[..., :nx], kv[..., nx:]
    qh = q.reshape(B, Tq, n_head, dh).transpose(0, 2, 1, 3)
    kh = k.reshape(B, Tk, n_head, dh).transpose(0, 2, 3, 1)
    vh = v.reshape(B, Tk, n_head, dh).transpose(0, 2, 1, 3)
    w = jnp.einsum("bhqd,bhdk->bhqk", qh, kh)
    if scale:
        w = w / math.sqrt(float(dh))
    if attention_mask is not None:
        w = w + attention_mask
    w = jax.nn.softmax(w, axis=-1)
    a = jnp.einsum("bhqk,bhkd->bhqd", w, vh)
    a = a.transpose(0, 2, 1, 3).reshape(B, Tq, nx)
    return a @ params["w_p"] + params["b_p"]


# ---------------------------------- main ----------------------------------------
if __name__ == "__main__":
    B, Tq, Tk, nx, n_head = 2, 8, 8, 32, 4
    scale = True

    key = jax.random.PRNGKey(0)
    k_x, k_ctx, k_wq, k_wkv, k_wp, k_mask = jax.random.split(key, 6)

    x = jax.random.normal(k_x, (B, Tq, nx), dtype=jnp.float32)
    ctx = jax.random.normal(k_ctx, (B, Tk, nx), dtype=jnp.float32)

    # Conv1D params: weight (nx, n_out) ~ N(0, 0.02), bias zeros (GPT-2 init)
    params = {
        "w_q": 0.02 * jax.random.normal(k_wq, (nx, nx), dtype=jnp.float32),
        "b_q": jnp.zeros((nx,), dtype=jnp.float32),
        "w_kv": 0.02 * jax.random.normal(k_wkv, (nx, 2 * nx), dtype=jnp.float32),
        "b_kv": jnp.zeros((2 * nx,), dtype=jnp.float32),
        "w_p": 0.02 * jax.random.normal(k_wp, (nx, nx), dtype=jnp.float32),
        "b_p": jnp.zeros((nx,), dtype=jnp.float32),
    }

    # additive attention mask (B, 1, 1, Tk): 0 for keep, -1e4 for masked keys
    mask_bits = jax.random.uniform(k_mask, (B, 1, 1, Tk)) < 0.25
    attention_mask = jnp.where(mask_bits, -1e4, 0.0).astype(jnp.float32)

    out = cross_attention(x, ctx, params, n_head, scale=scale,
                          attention_mask=attention_mask)
    out = jax.block_until_ready(out)

    ref = cross_attention_ref(x, ctx, params, n_head, scale=scale,
                              attention_mask=attention_mask)
    assert out.shape == (B, Tq, nx)
    # Tolerance loosened slightly vs exact f32 because the softmax denominator
    # uses the EUP approximate reciprocal (pl.reciprocal(..., approx=True)).
    assert jnp.allclose(out, ref, rtol=2e-3, atol=2e-3), "mismatch vs reference"

    print("KERNEL_OK")
</pallas_src>

<mosaic_0001>
module attributes {stable_mosaic.version = 11 : i64} {
  func.func @_linear_kernel(%arg0: i32, %arg1: i32, %arg2: memref<16x32xf32, #tpu.memory_space<vmem>>, %arg3: memref<32x32xf32, #tpu.memory_space<vmem>>, %arg4: memref<1x32xf32, #tpu.memory_space<vmem>>, %arg5: memref<16x32xf32, #tpu.memory_space<vmem>>) attributes {dimension_semantics = [#tpu.dimension_semantics<parallel>, #tpu.dimension_semantics<parallel>], iteration_bounds = array<i64: 1, 1>, scalar_prefetch = 0 : i64, scratch_operands = 0 : i64, tpu.core_type = #tpu.core_type<tc>, window_params = [{transform_indices = @transform_0, window_bounds = array<i64: 16, 32>}, {transform_indices = @transform_1, window_bounds = array<i64: 32, 32>}, {transform_indices = @transform_2, window_bounds = array<i64: 1, 32>}, {transform_indices = @transform_3, window_bounds = array<i64: 16, 32>}]} {
    %c0 = arith.constant 0 : index
    %c0_0 = arith.constant 0 : index
    %0 = vector.load %arg2[%c0, %c0_0] : memref<16x32xf32, #tpu.memory_space<vmem>>, vector<16x32xf32>
    %c0_1 = arith.constant 0 : index
    %c0_2 = arith.constant 0 : index
    %1 = vector.load %arg3[%c0_1, %c0_2] : memref<32x32xf32, #tpu.memory_space<vmem>>, vector<32x32xf32>
    %cst = arith.constant dense<0.000000e+00> : vector<16x32xf32>
    %2 = tpu.matmul %0, %1, %cst {dimension_numbers = #tpu.dot_dimension_numbers<[1], [0], [0], [1], [0, 0, 1, 1], [], []>} : vector<16x32xf32>, vector<32x32xf32>, vector<16x32xf32> -> vector<16x32xf32>
    %c0_3 = arith.constant 0 : index
    %c0_4 = arith.constant 0 : index
    %3 = vector.load %arg4[%c0_3, %c0_4] : memref<1x32xf32, #tpu.memory_space<vmem>>, vector<1x32xf32>
    %4 = vector.broadcast %3 : vector<1x32xf32> to vector<16x32xf32>
    %5 = arith.addf %2, %4 : vector<16x32xf32>
    %c0_5 = arith.constant 0 : index
    %c0_6 = arith.constant 0 : index
    %6 = vector.load %arg5[%c0_5, %c0_6] : memref<16x32xf32, #tpu.memory_space<vmem>>, vector<16x32xf32>
    tpu.vector_store %arg5[%c0_5, %c0_6], %5 {strides = array<i32>} : memref<16x32xf32, #tpu.memory_space<vmem>>, vector<16x32xf32>,
    return
  }
  func.func @transform_0(%arg0: i32, %arg1: i32) -> (i32, i32) {
    %c0_i32 = arith.constant 0 : i32
    %c0_i32_0 = arith.constant 0 : i32
    return %arg0, %c0_i32 : i32, i32
  }
  func.func @transform_1(%arg0: i32, %arg1: i32) -> (i32, i32) {
    %c0_i32 = arith.constant 0 : i32
    %c0_i32_0 = arith.constant 0 : i32
    return %c0_i32, %arg1 : i32, i32
  }
  func.func @transform_2(%arg0: i32, %arg1: i32) -> (i32, i32) {
    %c0_i32 = arith.constant 0 : i32
    %c0_i32_0 = arith.constant 0 : i32
    return %c0_i32, %arg1 : i32, i32
  }
  func.func @transform_3(%arg0: i32, %arg1: i32) -> (i32, i32) {
    %c0_i32 = arith.constant 0 : i32
    return %arg0, %arg1 : i32, i32
  }
}

</mosaic_0001>

<llo_original>
// kernel: tpu_custom_call.1
$region0: #{tpu_custom_call.1}
  #allocation0 [shape = 'u32[]', space=smem, size = 0x4, offset = 0x4, fixed_abs, tag = 'smem constant byte address 0x4 - core index']
  #allocation1 [shape = 'u32[144,128]{1,0:T(1,128)}', space=vmem, size = 0x12000, scoped, tag = 'internal scratch']
  %s0 = inlined_call_operand.hbm [shape: f32[16,32], index: 0, kind: input, shape index: {}]
  %s1 = inlined_call_operand.hbm [shape: f32[32,32], index: 1, kind: input, shape index: {}]
  %s2 = inlined_call_operand.vmem [shape: f32[1,32], index: 2, kind: input, shape index: {}]
  %s3 = inlined_call_operand.hbm [shape: f32[16,32], index: 3, kind: output, shape index: {}]
  %s4 = sld [smem:[#allocation0]]
  $region30: #{tpu_custom_call.1} parent=0
    _
  %s6 = ssub.s32 1, %s4
  %s7 = scalar_select 0, %s6, %s4
  $region1: #{tpu_custom_call.1} parent=0
    #allocation2 [shape = 'u8[8192]{0}', space=vmem, size = 0x2000, scoped, tag = 'input window, operand 0, single buffered']
    #allocation3 [shape = 's32[1]{0}', space=sflag, size = 0x4, scoped, tag = 'scoped memory for tpu_custom_call.1']
    #allocation4 [shape = 's32[1]{0}', space=sflag, size = 0x4, scoped, tag = 'scoped memory for tpu_custom_call.1']
    #allocation5 [shape = 'u8[16384]{0}', space=vmem, size = 0x4000, scoped, tag = 'input window, operand 1, single buffered']
    #allocation6 [shape = 's32[1]{0}', space=sflag, size = 0x4, scoped, tag = 'scoped memory for tpu_custom_call.1']
    #allocation7 [shape = 'u8[8192]{0}', space=vmem, size = 0x2000, scoped, tag = 'output window, operand 0, single buffered']
    %8 = vsyncpa [#allocation3], 0
    %9 = vsyncpa [#allocation6], 0
    %10 = vsyncpa [#allocation4], 0
    // Predicated region
    $region2: #{tpu_custom_call.1} parent=1 // pred_check
      _
    $region3: #{tpu_custom_call.1} parent=1 // pred_check_branch
      %12 = sbr.rel (0) target = $region5
    $region4: #{tpu_custom_call.1} parent=1 // pred_region
      %s14 = ssub.s32 256, 256
      %15 = vsyncadd [#allocation3], %s14
      %s16 = sshll.u32 [#allocation2], 4
      %s17 = int_to_ptr.vmem [resolvable:$true] %s16
      %22 = dma.hbm_to_vmem [thread:$0]  %s0, 256, %s17, [#allocation3], 128, 128, 8
    $region5: #{tpu_custom_call.1} parent=1 // pred_fallthru
      _
    // Predicated region
    $region6: #{tpu_custom_call.1} parent=1 // pred_check
      _
    $region7: #{tpu_custom_call.1} parent=1 // pred_check_branch
      %24 = sbr.rel (0) target = $region9
    $region8: #{tpu_custom_call.1} parent=1 // pred_region
      %s26 = ssub.s32 512, 512
      %27 = vsyncadd [#allocation6], %s26
      %s28 = sshll.u32 [#allocation5], 4
      %s29 = int_to_ptr.vmem [resolvable:$true] %s28
      %34 = dma.hbm_to_vmem [thread:$0]  %s1, 512, %s29, [#allocation6], 128, 128, 8
    $region9: #{tpu_custom_call.1} parent=1 // pred_fallthru
      _
    // Predicated region
    $region10: #{tpu_custom_call.1} parent=1 // pred_check
      _
    $region11: #{tpu_custom_call.1} parent=1 // pred_check_branch
      %36 = sbr.rel (0) target = $region13
    $region12: #{tpu_custom_call.1} parent=1 // pred_region
      _
    $region13: #{tpu_custom_call.1} parent=1 // pred_fallthru
      _
    // Predicated region
    $region14: #{tpu_custom_call.1} parent=1 // pred_check
      _
    $region15: #{tpu_custom_call.1} parent=1 // pred_check_branch
      %38 = sbr.rel (0) target = $region17
    $region16: #{tpu_custom_call.1} parent=1 // pred_region
      %39 = dma.done [#allocation3], 256
    $region17: #{tpu_custom_call.1} parent=1 // pred_fallthru
      _
    // Predicated region
    $region18: #{tpu_custom_call.1} parent=1 // pred_check
      _
    $region19: #{tpu_custom_call.1} parent=1 // pred_check_branch
      %41 = sbr.rel (0) target = $region21
    $region20: #{tpu_custom_call.1} parent=1 // pred_region
      %42 = dma.done [#allocation6], 512
    $region21: #{tpu_custom_call.1} parent=1 // pred_fallthru
      _
    %v43 = vld [vmem:[#allocation2] sm:$0xff]
    %v44 = vld [vmem:[#allocation2 + $0x8] sm:$0xff]
    %v45 = vld [vmem:[#allocation5] sm:$0xff]
    %v46 = vld [vmem:[#allocation5 + $0x8] sm:$0xff]
    %v47 = vld [vmem:[#allocation5 + $0x10] sm:$0xff]
    %v48 = vld [vmem:[#allocation5 + $0x18] sm:$0xff]
    %v49 = vld [vmem:[%s2] sm:$0x1]
    %v51 = vlaneseq
    %v52 = vshrl.u32 %v51, 7
    %v53 = vsub.s32 0, %v52
    %v54 = vrot.slane %v49, %v53
    %vm56 = vcmask 261120
    %v58 = vsel %vm56, %v43, 0
    %v61 = vsel %vm56, %v44, 0
    %63 = vmatprep.subr.mxu0 0.0
    %64 = vmatpush1.msra.mxu0 %v45
    %65 = vmatprep.subr.mxu0 0.0
    %66 = vmatpush1.msra.mxu0 %v46
    %67 = vmatprep.subr.mxu0 0.0
    %68 = vmatpush1.msra.mxu0 %v47
    %69 = vmatprep.subr.mxu0 0.0
    %70 = vmatpush1.msra.mxu0 %v48
    %71 = vmatprep.subr.mxu0 0.0
    %72 = vmatpush1.msra.mxu0 0.0
    %73 = vmatprep.subr.mxu0 0.0
    %74 = vmatpush1.msra.mxu0 0.0
    %75 = vmatprep.subr.mxu0 0.0
    %76 = vmatpush1.msra.mxu0 0.0
    %77 = vmatprep.subr.mxu0 0.0
    %78 = vmatpush1.msra.mxu0 0.0
    %79 = vmatprep.subr.mxu0 0.0
    %80 = vmatpush1.msra.mxu0 0.0
    %81 = vmatprep.subr.mxu0 0.0
    %82 = vmatpush1.msra.mxu0 0.0
    %83 = vmatprep.subr.mxu0 0.0
    %84 = vmatpush1.msra.mxu0 0.0
    %85 = vmatprep.subr.mxu0 0.0
    %86 = vmatpush1.msra.mxu0 0.0
    %87 = vmatprep.subr.mxu0 0.0
    %88 = vmatpush1.msra.mxu0 0.0
    %89 = vmatprep.subr.mxu0 0.0
    %90 = vmatpush1.msra.mxu0 0.0
    %91 = vmatprep.subr.mxu0 0.0
    %92 = vmatpush1.msra.mxu0 0.0
    %93 = vmatprep.subr.mxu0 0.0
    %94 = vmatpush1.msra.mxu0 0.0
    %95 = vmatprep.subr.mxu0 0.0
    %96 = vmatpush1.msra.mxu0 0.0
    %97 = vmatprep.subr.mxu0 0.0
    %98 = vmatpush1.msra.mxu0 0.0
    %99 = vmatprep.subr.mxu0 0.0
    %100 = vmatpush1.msra.mxu0 0.0
    %101 = vmatprep.subr.mxu0 0.0
    %102 = vmatpush1.msra.mxu0 0.0
    %103 = vmatprep.subr.mxu0 0.0
    %104 = vmatpush1.msra.mxu0 0.0
    %105 = vmatprep.subr.mxu0 0.0
    %106 = vmatpush1.msra.mxu0 0.0
    %107 = vmatprep.subr.mxu0 0.0
    %108 = vmatpush1.msra.mxu0 0.0
    %109 = vmatprep.subr.mxu0 0.0
    %110 = vmatpush1.msra.mxu0 0.0
    %111 = vmatprep.subr.mxu0 0.0
    %112 = vmatpush1.msra.mxu0 0.0
    %113 = vmatprep.subr.mxu0 0.0
    %114 = vmatpush1.msra.mxu0 0.0
    %115 = vmatprep.subr.mxu0 0.0
    %116 = vmatpush1.msra.mxu0 0.0
    %117 = vmatprep.subr.mxu0 0.0
    %118 = vmatpush1.msra.mxu0 0.0
    %119 = vmatprep.subr.mxu0 0.0
    %120 = vmatpush1.msra.mxu0 0.0
    %121 = vmatprep.subr.mxu0 0.0
    %122 = vmatpush1.msra.mxu0 0.0
    %123 = vmatprep.subr.mxu0 0.0
    %124 = vmatpush1.msra.mxu0 0.0
    %125 = vmatprep.subr.mxu0 0.0
    %126 = vmatpush1.msra.mxu0 0.0
    %127 = vmatprep.mubr.f32.mxu0 0.0
    %128 = vmatmul.mubr.f32.gmra.mrb[0].mxu0 %v58
    %v129 = vpop.f32.mrb[0].mxu0
    %v130 = vadd.f32 %v54, %v129
    %v131 = vpop.f32.mrb[0].mxu0
    %132 = vmatprep.mubr.f32.mxu0 0.0
    %133 = vmatmul.mubr.f32.gmra.mrb[0].mxu0 %v61
    %v134 = vpop.f32.mrb[0].mxu0
    %v135 = vadd.f32 %v54, %v134
    %v136 = vpop.f32.mrb[0].mxu0
    %137 = vdwg.mxu0
    %138 = vst.msk [vmem:[#allocation7] sm:$0xff] %vm56, %v130
    %139 = vst.msk [vmem:[#allocation7 + $0x8] sm:$0xff] %vm56, %v135
    // Predicated region
    $region22: #{tpu_custom_call.1} parent=1 // pred_check
      _
    $region23: #{tpu_custom_call.1} parent=1 // pred_check_branch
      %141 = sbr.rel (0) target = $region25
    $region24: #{tpu_custom_call.1} parent=1 // pred_region
      %s143 = ssub.s32 256, 256
      %144 = vsyncadd [#allocation4], %s143
      %s145 = sshll.u32 [#allocation7], 4
      %s146 = int_to_ptr.vmem [resolvable:$true] %s145
      %151 = dma.vmem_to_hbm [thread:$0]  %s146, 256, %s3, [#allocation4], 128, 128, 8
    $region25: #{tpu_custom_call.1} parent=1 // pred_fallthru
      _
    // Predicated region
    $region26: #{tpu_custom_call.1} parent=1 // pred_check
      _
    $region27: #{tpu_custom_call.1} parent=1 // pred_check_branch
      %153 = sbr.rel (0) target = $region29
    $region28: #{tpu_custom_call.1} parent=1 // pred_region
      %154 = dma.done [#allocation4], 256
    $region29: #{tpu_custom_call.1} parent=1 // pred_fallthru
      _
    %155 = vsyncpa [#allocation3], 1
    %156 = vsyncpa [#allocation6], 1
    %157 = vsyncpa [#allocation4], 1

</llo_original>
